<compile_context>
chip_gen: v6e
topology: v6e:2x2x1
jax: 0.10.0
libtpu: 0.0.40
codegen_flags: <defaults>
</compile_context>

<pallas_src>
import jax
import jax.numpy as jnp
from jax.experimental import pallas as pl
from jax.experimental.pallas import tpu as pltpu


def _film_split_kernel(img_ref, gamma_ref, beta_ref, out_ref):
    """gamma/beta arrive as separate lane-aligned (TB, C) tiles."""
    out_ref[...] = (gamma_ref[...] * img_ref[...] + beta_ref[...]).astype(
        out_ref.dtype
    )


def _film_fused_kernel(img_ref, aux_ref, out_ref):
    """aux arrives as one (TB, 2C) tile; static lane slice inside the kernel."""
    c = img_ref.shape[-1]
    gamma = aux_ref[:, :c]
    beta = aux_ref[:, c:]
    out_ref[...] = (gamma * img_ref[...] + beta).astype(out_ref.dtype)


def _sublane_multiple(itemsize: int) -> int:
    # f32 -> 8, bf16 -> 16, int8/fp8 -> 32 rows per packed sublane tile.
    return max(8, 32 // max(itemsize, 1))


def film_layer(img_feat: jax.Array, aux_feat: jax.Array) -> jax.Array:
    """Pallas FiLM layer: out = aux[:, :C] * img + aux[:, C:]."""
    B, C = img_feat.shape
    assert aux_feat.shape == (B, 2 * C), "aux_feat must be (B, 2*C)"

    out_dtype = jnp.result_type(img_feat.dtype, aux_feat.dtype)
    itemsize = max(
        jnp.dtype(img_feat.dtype).itemsize, jnp.dtype(aux_feat.dtype).itemsize
    )

    # --- pick the batch tile TB from a VMEM budget -------------------------
    # Double-buffered footprint ~ 2 * (img + gamma + beta + out) rows
    #                          ~ 8 * TB * C * itemsize bytes.
    # 24 MiB budget keeps 2-deep pipelining comfortable on v7x (64 MiB VMEM)
    # and well under the limits on v5e/v6e.
    vmem_budget = 24 << 20
    bytes_per_row = 8 * C * itemsize
    tb = max(1, vmem_budget // bytes_per_row)
    if tb >= B:
        tb = B  # whole batch in one block (block == full-dim exception)
    else:
        sub = _sublane_multiple(itemsize)
        tb = max(sub, (tb // sub) * sub)
    grid = (pl.cdiv(B, tb),)

    # --- choose gamma/beta split strategy ----------------------------------
    if C % 128 == 0:
        # Lane-aligned split via BlockSpec: aux passed twice, block-column 0
        # (gamma) and 1 (beta).  Each aux element is still read exactly once.
        kernel = _film_split_kernel
        in_specs = [
            pl.BlockSpec((tb, C), lambda i: (i, 0)),  # img
            pl.BlockSpec((tb, C), lambda i: (i, 0)),  # gamma = aux cols [0, C)
            pl.BlockSpec((tb, C), lambda i: (i, 1)),  # beta  = aux cols [C, 2C)
        ]
        operands = (img_feat, aux_feat, aux_feat)
    else:
        # C not lane-aligned (e.g. default 64): take the whole (TB, 2C) aux
        # tile and slice it statically inside the kernel.
        kernel = _film_fused_kernel
        in_specs = [
            pl.BlockSpec((tb, C), lambda i: (i, 0)),
            pl.BlockSpec((tb, 2 * C), lambda i: (i, 0)),
        ]
        operands = (img_feat, aux_feat)

    return pl.pallas_call(
        kernel,
        out_shape=jax.ShapeDtypeStruct((B, C), out_dtype),
        grid_spec=pltpu.PrefetchScalarGridSpec(
            num_scalar_prefetch=0,
            grid=grid,
            in_specs=in_specs,
            out_specs=pl.BlockSpec((tb, C), lambda i: (i, 0)),
        ),
        compiler_params=pltpu.CompilerParams(
            # Batch tiles are independent -> shard across v7x's 2 TensorCores.
            dimension_semantics=("parallel",),
            # Room for large double-buffered tiles; <= physical VMEM on all of
            # v5e/v6e (128 MiB) and v7x (64 MiB).
            vmem_limit_bytes=48 << 20,
        ),
    )(*operands)


if __name__ == "__main__":
    def ref_film(img, aux, c):
        return aux[:, :c] * img + aux[:, c:]

    key = jax.random.PRNGKey(0)
    k1, k2, k3, k4 = jax.random.split(key, 4)

    # Case 1: module default in_dim=64 (fused in-kernel split path).
    B1, C1 = 8, 64
    img1 = jax.random.normal(k1, (B1, C1), dtype=jnp.float32)
    aux1 = jax.random.normal(k2, (B1, 2 * C1), dtype=jnp.float32)
    out1 = film_layer(img1, aux1)
    jax.block_until_ready(out1)
    ref1 = ref_film(img1, aux1, C1)
    assert out1.shape == ref1.shape and out1.dtype == ref1.dtype
    assert jnp.allclose(out1, ref1, atol=1e-6, rtol=1e-6), "mismatch (C=64)"

    # Case 2: lane-aligned path (C % 128 == 0) — gamma/beta split by BlockSpec.
    B2, C2 = 16, 128
    img2 = jax.random.normal(k3, (B2, C2), dtype=jnp.float32)
    aux2 = jax.random.normal(k4, (B2, 2 * C2), dtype=jnp.float32)
    out2 = film_layer(img2, aux2)
    jax.block_until_ready(out2)
    ref2 = ref_film(img2, aux2, C2)
    assert out2.shape == ref2.shape and out2.dtype == ref2.dtype
    assert jnp.allclose(out2, ref2, atol=1e-6, rtol=1e-6), "mismatch (C=128)"

    print("KERNEL_OK")
</pallas_src>

<mosaic_0001>
module attributes {stable_mosaic.version = 11 : i64} {
  func.func @_film_fused_kernel(%arg0: i32, %arg1: memref<8x64xf32, #tpu.memory_space<vmem>>, %arg2: memref<8x128xf32, #tpu.memory_space<vmem>>, %arg3: memref<8x64xf32, #tpu.memory_space<vmem>>) attributes {dimension_semantics = [#tpu.dimension_semantics<parallel>], iteration_bounds = array<i64: 1>, scalar_prefetch = 0 : i64, scratch_operands = 0 : i64, tpu.core_type = #tpu.core_type<tc>, window_params = [{transform_indices = @transform_0, window_bounds = array<i64: 8, 64>}, {transform_indices = @transform_1, window_bounds = array<i64: 8, 128>}, {transform_indices = @transform_2, window_bounds = array<i64: 8, 64>}]} {
    %c0 = arith.constant 0 : index
    %c0_0 = arith.constant 0 : index
    %0 = vector.load %arg2[%c0, %c0_0] : memref<8x128xf32, #tpu.memory_space<vmem>>, vector<8x64xf32>
    %c0_1 = arith.constant 0 : index
    %c64 = arith.constant 64 : index
    %1 = vector.load %arg2[%c0_1, %c64] : memref<8x128xf32, #tpu.memory_space<vmem>>, vector<8x64xf32>
    %c0_2 = arith.constant 0 : index
    %c0_3 = arith.constant 0 : index
    %2 = vector.load %arg1[%c0_2, %c0_3] : memref<8x64xf32, #tpu.memory_space<vmem>>, vector<8x64xf32>
    %3 = arith.mulf %0, %2 : vector<8x64xf32>
    %4 = arith.addf %3, %1 : vector<8x64xf32>
    %c0_4 = arith.constant 0 : index
    %c0_5 = arith.constant 0 : index
    %5 = vector.load %arg3[%c0_4, %c0_5] : memref<8x64xf32, #tpu.memory_space<vmem>>, vector<8x64xf32>
    tpu.vector_store %arg3[%c0_4, %c0_5], %4 {strides = array<i32>} : memref<8x64xf32, #tpu.memory_space<vmem>>, vector<8x64xf32>,
    return
  }
  func.func @transform_0(%arg0: i32) -> (i32, i32) {
    %c0_i32 = arith.constant 0 : i32
    %c0_i32_0 = arith.constant 0 : i32
    return %arg0, %c0_i32 : i32, i32
  }
  func.func @transform_1(%arg0: i32) -> (i32, i32) {
    %c0_i32 = arith.constant 0 : i32
    %c0_i32_0 = arith.constant 0 : i32
    return %arg0, %c0_i32 : i32, i32
  }
  func.func @transform_2(%arg0: i32) -> (i32, i32) {
    %c0_i32 = arith.constant 0 : i32
    %c0_i32_0 = arith.constant 0 : i32
    return %arg0, %c0_i32 : i32, i32
  }
}

</mosaic_0001>

<llo_original>
// kernel: tpu_custom_call.1
$region0: #{tpu_custom_call.1}
  #allocation0 [shape = 'u32[]', space=smem, size = 0x4, offset = 0x4, fixed_abs, tag = 'smem constant byte address 0x4 - core index']
  #allocation1 [shape = 'u32[144,128]{1,0:T(1,128)}', space=vmem, size = 0x12000, scoped, tag = 'internal scratch']
  %s0 = inlined_call_operand.hbm [shape: f32[8,64], index: 0, kind: input, shape index: {}]
  %s1 = inlined_call_operand.hbm [shape: f32[8,128], index: 1, kind: input, shape index: {}]
  %s2 = inlined_call_operand.hbm [shape: f32[8,64], index: 2, kind: output, shape index: {}]
  %s3 = sld [smem:[#allocation0]]
  $region26: #{tpu_custom_call.1} parent=0
    _
  %s5 = ssub.s32 1, %s3
  %s6 = scalar_select 0, %s5, %s3
  $region1: #{tpu_custom_call.1} parent=0
    #allocation2 [shape = 'u8[4096]{0}', space=vmem, size = 0x1000, scoped, tag = 'input window, operand 0, single buffered']
    #allocation3 [shape = 's32[1]{0}', space=sflag, size = 0x4, scoped, tag = 'scoped memory for tpu_custom_call.1']
    #allocation4 [shape = 's32[1]{0}', space=sflag, size = 0x4, scoped, tag = 'scoped memory for tpu_custom_call.1']
    #allocation5 [shape = 'u8[4096]{0}', space=vmem, size = 0x1000, scoped, tag = 'input window, operand 1, single buffered']
    #allocation6 [shape = 's32[1]{0}', space=sflag, size = 0x4, scoped, tag = 'scoped memory for tpu_custom_call.1']
    #allocation7 [shape = 'u8[4096]{0}', space=vmem, size = 0x1000, scoped, tag = 'output window, operand 0, single buffered']
    %7 = vsyncpa [#allocation3], 0
    %8 = vsyncpa [#allocation6], 0
    %9 = vsyncpa [#allocation4], 0
    // Predicated region
    $region2: #{tpu_custom_call.1} parent=1 // pred_check
      _
    $region3: #{tpu_custom_call.1} parent=1 // pred_check_branch
      %11 = sbr.rel (0) target = $region5
    $region4: #{tpu_custom_call.1} parent=1 // pred_region
      %s13 = ssub.s32 128, 128
      %14 = vsyncadd [#allocation3], %s13
      %s16 = sshll.u32 [#allocation2], 4
      %s17 = int_to_ptr.vmem [resolvable:$true] %s16
      %19 = dma.hbm_to_vmem [thread:$0]  %s0, 128, %s17, [#allocation3]
    $region5: #{tpu_custom_call.1} parent=1 // pred_fallthru
      _
    // Predicated region
    $region6: #{tpu_custom_call.1} parent=1 // pred_check
      _
    $region7: #{tpu_custom_call.1} parent=1 // pred_check_branch
      %21 = sbr.rel (0) target = $region9
    $region8: #{tpu_custom_call.1} parent=1 // pred_region
      %s23 = ssub.s32 128, 128
      %24 = vsyncadd [#allocation6], %s23
      %s26 = sshll.u32 [#allocation5], 4
      %s27 = int_to_ptr.vmem [resolvable:$true] %s26
      %29 = dma.hbm_to_vmem [thread:$0]  %s1, 128, %s27, [#allocation6]
    $region9: #{tpu_custom_call.1} parent=1 // pred_fallthru
      _
    // Predicated region
    $region10: #{tpu_custom_call.1} parent=1 // pred_check
      _
    $region11: #{tpu_custom_call.1} parent=1 // pred_check_branch
      %31 = sbr.rel (0) target = $region13
    $region12: #{tpu_custom_call.1} parent=1 // pred_region
      %32 = dma.done [#allocation3], 128
    $region13: #{tpu_custom_call.1} parent=1 // pred_fallthru
      _
    // Predicated region
    $region14: #{tpu_custom_call.1} parent=1 // pred_check
      _
    $region15: #{tpu_custom_call.1} parent=1 // pred_check_branch
      %34 = sbr.rel (0) target = $region17
    $region16: #{tpu_custom_call.1} parent=1 // pred_region
      %35 = dma.done [#allocation6], 128
    $region17: #{tpu_custom_call.1} parent=1 // pred_fallthru
      _
    %v36 = vld [vmem:[#allocation5] sm:$0xff]
    %v37 = vld [vmem:[#allocation2] sm:$0xff]
    %v38 = vmul.f32 %v36, %v37
    %40 = vrot.lane.b32.xlu0 %v36, 64
    %v41 = vpop.permute.xlu0 %40
    %v43 = vadd.f32 %v38, %v41
    %vm44 = vcmask 523264
    %45 = vst.msk [vmem:[#allocation7] sm:$0xff] %vm44, %v43
    // Predicated region
    $region18: #{tpu_custom_call.1} parent=1 // pred_check
      _
    $region19: #{tpu_custom_call.1} parent=1 // pred_check_branch
      %47 = sbr.rel (0) target = $region21
    $region20: #{tpu_custom_call.1} parent=1 // pred_region
      %s49 = ssub.s32 128, 128
      %50 = vsyncadd [#allocation4], %s49
      %s52 = sshll.u32 [#allocation7], 4
      %s53 = int_to_ptr.vmem [resolvable:$true] %s52
      %55 = dma.vmem_to_hbm [thread:$0]  %s53, 128, %s2, [#allocation4]
    $region21: #{tpu_custom_call.1} parent=1 // pred_fallthru
      _
    // Predicated region
    $region22: #{tpu_custom_call.1} parent=1 // pred_check
      _
    $region23: #{tpu_custom_call.1} parent=1 // pred_check_branch
      %57 = sbr.rel (0) target = $region25
    $region24: #{tpu_custom_call.1} parent=1 // pred_region
      %58 = dma.done [#allocation4], 128
    $region25: #{tpu_custom_call.1} parent=1 // pred_fallthru
      _
    %59 = vsyncpa [#allocation3], 1
    %60 = vsyncpa [#allocation6], 1
    %61 = vsyncpa [#allocation4], 1

</llo_original>
